<compile_context>
chip_gen: v6e
topology: v6e:2x2x1
jax: 0.10.0
libtpu: 0.0.40
codegen_flags: <defaults>
</compile_context>

<pallas_src>
import functools

import jax
import jax.numpy as jnp
from jax import lax
from jax.experimental import pallas as pl
from jax.experimental.pallas import tpu as pltpu


def _round_up(n, m):
    return int(pl.cdiv(int(n), int(m))) * int(m)


def _default_bf16_epilogue():
    """bf16 VPU exists on v6e/v7x; older chips (<= v5) run the epilogue in f32."""
    try:
        kind = jax.devices()[0].device_kind.lower()
    except Exception:
        return True
    return not any(tag in kind for tag in ("v2", "v3", "v4", "v5"))


def _discriminator_kernel(x_ref, w1_ref, b1_ref, w2_ref, b2_ref, w3_ref, b3_ref,
                          o_ref, *, bf16_epilogue):
    # x_ref : (TILE_B, IN)  f32  -- batch-major block streamed from HBM
    # w*_ref: native PyTorch [out, in] layout, bf16 (VMEM-resident)
    # b*_ref: [out, 1] columns (bf16 or f32 depending on epilogue mode)
    x = x_ref[...].astype(jnp.bfloat16)          # in-kernel pack (cheap, VALU)

    def epilogue(h_f32, b_ref):
        if bf16_epilogue:
            h = h_f32.astype(jnp.bfloat16) + b_ref[...]
        else:
            h = h_f32 + b_ref[...]
        h = jnp.maximum(h, 0.2 * h)              # LeakyReLU(0.2), slope < 1
        if not bf16_epilogue:
            h = h.astype(jnp.bfloat16)
        return h

    # Layer 1: h1[f, b] = sum_i W1[f, i] * x[b, i]  -> (64, TILE_B), f32 acc on MXU.
    # TODO(synk): on v5e, check the bundle dump that this N-T dot_general does not
    # insert a per-tile x transpose in the vector-extended slot (shared with vmatmul).
    h1 = lax.dot_general(w1_ref[...], x, (((1,), (1,)), ((), ())),
                         preferred_element_type=jnp.float32)
    h1 = epilogue(h1, b1_ref)

    # Layer 2: (32, 64) @ (64, TILE_B) -> (32, TILE_B)
    h2 = jnp.dot(w2_ref[...], h1, preferred_element_type=jnp.float32)
    h2 = epilogue(h2, b2_ref)

    # Layer 3: (1, 32) @ (32, TILE_B) -> (1, TILE_B); sigmoid in f32 via EUP recip.
    h3 = jnp.dot(w3_ref[...], h2, preferred_element_type=jnp.float32) + b3_ref[...]
    o_ref[...] = pl.reciprocal(1.0 + jnp.exp(-h3), approx=True).astype(o_ref.dtype)


def discriminator_forward(x, params, *, tile_b=8192, bf16_epilogue=None):
    """x: [B, input_dim] f32. params: PyTorch-convention weights [out, in], biases [out]."""
    if bf16_epilogue is None:
        bf16_epilogue = _default_bf16_epilogue()

    w1, b1 = params["w1"], params["b1"]
    w2, b2 = params["w2"], params["b2"]
    w3, b3 = params["w3"], params["b3"]

    B, in_dim = x.shape
    f32, bf16 = jnp.float32, jnp.bfloat16

    # Tile size: multiple of 128 (lane-dense output block), clamped so small
    # batches don't compute a huge padded tile and so that (when the batch
    # allows) there are >= 2 grid steps for v7x's two TensorCores.
    tile_b = _round_up(max(int(tile_b), 1), 128)
    tile_b = min(tile_b, max(128, _round_up(pl.cdiv(B, 2), 128)))
    num_tiles = int(pl.cdiv(B, tile_b))

    b_epi_dtype = bf16 if bf16_epilogue else f32
    args = (
        x,                                                    # f32, cast in-kernel
        w1.astype(bf16), b1.reshape(-1, 1).astype(b_epi_dtype),
        w2.astype(bf16), b2.reshape(-1, 1).astype(b_epi_dtype),
        w3.astype(bf16), b3.reshape(-1, 1).astype(f32),
    )

    const = lambda i: (0, 0)                                  # weights stay resident
    in_specs = [
        pl.BlockSpec((tile_b, in_dim), lambda i: (i, 0)),     # x: streamed per tile
        pl.BlockSpec(tuple(w1.shape), const),
        pl.BlockSpec((w1.shape[0], 1), const),
        pl.BlockSpec(tuple(w2.shape), const),
        pl.BlockSpec((w2.shape[0], 1), const),
        pl.BlockSpec(tuple(w3.shape), const),
        pl.BlockSpec((w3.shape[0], 1), const),
    ]
    out_specs = pl.BlockSpec((1, tile_b), lambda i: (0, i))   # lane-dense output row

    b_eff = num_tiles * tile_b
    flops = 2 * b_eff * (in_dim * 64 + 64 * 32 + 32 * 1)
    bytes_accessed = (B * in_dim * 4 + B * 4                  # x (f32) + out (f32)
                      + (int(w1.size) + int(w2.size) + int(w3.size)) * 2
                      + (int(b1.size) + int(b2.size) + int(b3.size)) * 4)

    out = pl.pallas_call(
        functools.partial(_discriminator_kernel, bf16_epilogue=bf16_epilogue),
        out_shape=jax.ShapeDtypeStruct((1, B), f32),
        grid_spec=pltpu.PrefetchScalarGridSpec(
            num_scalar_prefetch=0,
            grid=(num_tiles,),
            in_specs=in_specs,
            out_specs=out_specs,
        ),
        compiler_params=pltpu.CompilerParams(
            dimension_semantics=("parallel",),
            vmem_limit_bytes=32 * 1024 * 1024),
        cost_estimate=pl.CostEstimate(
            flops=int(flops),
            transcendentals=int(b_eff),
            bytes_accessed=int(bytes_accessed)),
    )(*args)

    return out.reshape(B, 1)


def init_params(key, input_dim):
    """Deterministic init; shapes follow the PyTorch module's __init__."""
    k1, k2, k3, k4, k5, k6 = jax.random.split(key, 6)

    def uniform(k, shape, fan_in):
        bound = 1.0 / jnp.sqrt(fan_in)
        return jax.random.uniform(k, shape, jnp.float32, -bound, bound)

    return {
        "w1": uniform(k1, (64, input_dim), input_dim),
        "b1": uniform(k2, (64,), input_dim),
        "w2": uniform(k3, (32, 64), 64),
        "b2": uniform(k4, (32,), 64),
        "w3": uniform(k5, (1, 32), 32),
        "b3": uniform(k6, (1,), 32),
    }


if __name__ == "__main__":
    key = jax.random.PRNGKey(0)
    k_x, k_p = jax.random.split(key)

    input_dim = 32
    params = init_params(k_p, input_dim)
    use_bf16_epi = _default_bf16_epilogue()

    def ref_f32(x, p):
        h = x @ p["w1"].T + p["b1"]
        h = jnp.where(h >= 0, h, 0.2 * h)
        h = h @ p["w2"].T + p["b2"]
        h = jnp.where(h >= 0, h, 0.2 * h)
        h = h @ p["w3"].T + p["b3"]
        return jax.nn.sigmoid(h)

    def ref_matched(x, p, bf16_epilogue):
        # Same bf16-matmul / epilogue-dtype split as the kernel.
        bf = jnp.bfloat16

        def epi(h, b):
            if bf16_epilogue:
                h = h.astype(bf) + b.astype(bf)
            else:
                h = h + b
            h = jnp.maximum(h, 0.2 * h)
            if not bf16_epilogue:
                h = h.astype(bf)
            return h

        h = jnp.dot(x.astype(bf), p["w1"].T.astype(bf),
                    preferred_element_type=jnp.float32)
        h = epi(h, p["b1"])
        h = jnp.dot(h, p["w2"].T.astype(bf), preferred_element_type=jnp.float32)
        h = epi(h, p["b2"])
        h = jnp.dot(h, p["w3"].T.astype(bf),
                    preferred_element_type=jnp.float32) + p["b3"]
        return jax.nn.sigmoid(h)

    # Case 1: ragged batch, small tile -> multiple grid steps + partial last block.
    x1 = jax.random.normal(k_x, (300, input_dim), dtype=jnp.float32)
    out1 = jax.block_until_ready(discriminator_forward(x1, params, tile_b=128))
    assert out1.shape == (300, 1)
    assert jnp.allclose(out1, ref_matched(x1, params, use_bf16_epi), atol=1e-2)
    assert jnp.allclose(out1, ref_f32(x1, params), atol=3e-2)

    # Case 2: aligned batch, default tile (clamped so the grid still has 2 steps).
    x2 = jax.random.normal(jax.random.PRNGKey(1), (256, input_dim), dtype=jnp.float32)
    out2 = jax.block_until_ready(discriminator_forward(x2, params))
    assert out2.shape == (256, 1)
    assert jnp.allclose(out2, ref_matched(x2, params, use_bf16_epi), atol=1e-2)
    assert jnp.allclose(out2, ref_f32(x2, params), atol=3e-2)

    print("KERNEL_OK")
</pallas_src>

<mosaic_0001>
module attributes {stable_mosaic.version = 11 : i64} {
  func.func @_discriminator_kernel(%arg0: i32, %arg1: memref<128x32xf32, #tpu.memory_space<vmem>>, %arg2: memref<64x32xbf16, #tpu.memory_space<vmem>>, %arg3: memref<64x1xbf16, #tpu.memory_space<vmem>>, %arg4: memref<32x64xbf16, #tpu.memory_space<vmem>>, %arg5: memref<32x1xbf16, #tpu.memory_space<vmem>>, %arg6: memref<1x32xbf16, #tpu.memory_space<vmem>>, %arg7: memref<1x1xf32, #tpu.memory_space<vmem>>, %arg8: memref<1x128xf32, #tpu.memory_space<vmem>>) attributes {dimension_semantics = [#tpu.dimension_semantics<parallel>], iteration_bounds = array<i64: 3>, scalar_prefetch = 0 : i64, scratch_operands = 0 : i64, tpu.core_type = #tpu.core_type<tc>, window_params = [{transform_indices = @transform_0, window_bounds = array<i64: 128, 32>}, {pipeline_mode = #tpu.pipeline_mode<synchronous>, transform_indices = @transform_1, window_bounds = array<i64: 64, 32>}, {pipeline_mode = #tpu.pipeline_mode<synchronous>, transform_indices = @transform_2, window_bounds = array<i64: 64, 1>}, {pipeline_mode = #tpu.pipeline_mode<synchronous>, transform_indices = @transform_3, window_bounds = array<i64: 32, 64>}, {pipeline_mode = #tpu.pipeline_mode<synchronous>, transform_indices = @transform_4, window_bounds = array<i64: 32, 1>}, {pipeline_mode = #tpu.pipeline_mode<synchronous>, transform_indices = @transform_5, window_bounds = array<i64: 1, 32>}, {pipeline_mode = #tpu.pipeline_mode<synchronous>, transform_indices = @transform_6, window_bounds = array<i64: 1, 1>}, {transform_indices = @transform_7, window_bounds = array<i64: 1, 128>}]} {
    %c0 = arith.constant 0 : index
    %c0_0 = arith.constant 0 : index
    %0 = vector.load %arg1[%c0, %c0_0] : memref<128x32xf32, #tpu.memory_space<vmem>>, vector<128x32xf32>
    %1 = arith.truncf %0 : vector<128x32xf32> to vector<128x32xbf16>
    %c0_1 = arith.constant 0 : index
    %c0_2 = arith.constant 0 : index
    %2 = vector.load %arg2[%c0_1, %c0_2] : memref<64x32xbf16, #tpu.memory_space<vmem>>, vector<64x32xbf16>
    %cst = arith.constant dense<0.000000e+00> : vector<64x128xf32>
    %3 = tpu.matmul %2, %1, %cst {dimension_numbers = #tpu.dot_dimension_numbers<[1], [1], [0], [0], [0, 0, 1, 0], [], []>} : vector<64x32xbf16>, vector<128x32xbf16>, vector<64x128xf32> -> vector<64x128xf32>
    %4 = arith.truncf %3 : vector<64x128xf32> to vector<64x128xbf16>
    %c0_3 = arith.constant 0 : index
    %c0_4 = arith.constant 0 : index
    %5 = vector.load %arg3[%c0_3, %c0_4] : memref<64x1xbf16, #tpu.memory_space<vmem>>, vector<64x1xbf16>
    %6 = vector.broadcast %5 : vector<64x1xbf16> to vector<64x128xbf16>
    %7 = arith.addf %4, %6 : vector<64x128xbf16>
    %cst_5 = arith.constant 2.001950e-01 : bf16
    %8 = vector.broadcast %cst_5 : bf16 to vector<64x128xbf16>
    %9 = arith.mulf %8, %7 : vector<64x128xbf16>
    %10 = arith.maximumf %7, %9 : vector<64x128xbf16>
    %c0_6 = arith.constant 0 : index
    %c0_7 = arith.constant 0 : index
    %11 = vector.load %arg4[%c0_6, %c0_7] : memref<32x64xbf16, #tpu.memory_space<vmem>>, vector<32x64xbf16>
    %cst_8 = arith.constant dense<0.000000e+00> : vector<32x128xf32>
    %12 = tpu.matmul %11, %10, %cst_8 {dimension_numbers = #tpu.dot_dimension_numbers<[1], [0], [0], [1], [0, 0, 1, 1], [], []>} : vector<32x64xbf16>, vector<64x128xbf16>, vector<32x128xf32> -> vector<32x128xf32>
    %13 = arith.truncf %12 : vector<32x128xf32> to vector<32x128xbf16>
    %c0_9 = arith.constant 0 : index
    %c0_10 = arith.constant 0 : index
    %14 = vector.load %arg5[%c0_9, %c0_10] : memref<32x1xbf16, #tpu.memory_space<vmem>>, vector<32x1xbf16>
    %15 = vector.broadcast %14 : vector<32x1xbf16> to vector<32x128xbf16>
    %16 = arith.addf %13, %15 : vector<32x128xbf16>
    %cst_11 = arith.constant 2.001950e-01 : bf16
    %17 = vector.broadcast %cst_11 : bf16 to vector<32x128xbf16>
    %18 = arith.mulf %17, %16 : vector<32x128xbf16>
    %19 = arith.maximumf %16, %18 : vector<32x128xbf16>
    %c0_12 = arith.constant 0 : index
    %c0_13 = arith.constant 0 : index
    %20 = vector.load %arg6[%c0_12, %c0_13] : memref<1x32xbf16, #tpu.memory_space<vmem>>, vector<1x32xbf16>
    %cst_14 = arith.constant dense<0.000000e+00> : vector<1x128xf32>
    %21 = tpu.matmul %20, %19, %cst_14 {dimension_numbers = #tpu.dot_dimension_numbers<[1], [0], [0], [1], [0, 0, 1, 1], [], []>} : vector<1x32xbf16>, vector<32x128xbf16>, vector<1x128xf32> -> vector<1x128xf32>
    %c0_15 = arith.constant 0 : index
    %c0_16 = arith.constant 0 : index
    %22 = vector.load %arg7[%c0_15, %c0_16] : memref<1x1xf32, #tpu.memory_space<vmem>>, vector<1x1xf32>
    %23 = vector.broadcast %22 : vector<1x1xf32> to vector<1x128xf32>
    %24 = arith.addf %21, %23 : vector<1x128xf32>
    %cst_17 = arith.constant 0.000000e+00 : f32
    %25 = vector.broadcast %cst_17 : f32 to vector<1x128xf32>
    %26 = arith.subf %25, %24 : vector<1x128xf32>
    %27 = math.exp %26 : vector<1x128xf32>
    %cst_18 = arith.constant 1.000000e+00 : f32
    %28 = vector.broadcast %cst_18 : f32 to vector<1x128xf32>
    %29 = arith.addf %28, %27 : vector<1x128xf32>
    %30 = tpu.reciprocal %29 {approx = true} : vector<1x128xf32> -> vector<1x128xf32>
    %c0_19 = arith.constant 0 : index
    %c0_20 = arith.constant 0 : index
    %31 = vector.load %arg8[%c0_19, %c0_20] : memref<1x128xf32, #tpu.memory_space<vmem>>, vector<1x128xf32>
    tpu.vector_store %arg8[%c0_19, %c0_20], %30 {strides = array<i32>} : memref<1x128xf32, #tpu.memory_space<vmem>>, vector<1x128xf32>,
    return
  }
  func.func @transform_0(%arg0: i32) -> (i32, i32) {
    %c0_i32 = arith.constant 0 : i32
    %c0_i32_0 = arith.constant 0 : i32
    return %arg0, %c0_i32 : i32, i32
  }
  func.func @transform_1(%arg0: i32) -> (i32, i32) {
    %c0_i32 = arith.constant 0 : i32
    %c0_i32_0 = arith.constant 0 : i32
    %c0_i32_1 = arith.constant 0 : i32
    return %c0_i32, %c0_i32_0 : i32, i32
  }
  func.func @transform_2(%arg0: i32) -> (i32, i32) {
    %c0_i32 = arith.constant 0 : i32
    %c0_i32_0 = arith.constant 0 : i32
    %c0_i32_1 = arith.constant 0 : i32
    return %c0_i32, %c0_i32_0 : i32, i32
  }
  func.func @transform_3(%arg0: i32) -> (i32, i32) {
    %c0_i32 = arith.constant 0 : i32
    %c0_i32_0 = arith.constant 0 : i32
    %c0_i32_1 = arith.constant 0 : i32
    return %c0_i32, %c0_i32_0 : i32, i32
  }
  func.func @transform_4(%arg0: i32) -> (i32, i32) {
    %c0_i32 = arith.constant 0 : i32
    %c0_i32_0 = arith.constant 0 : i32
    %c0_i32_1 = arith.constant 0 : i32
    return %c0_i32, %c0_i32_0 : i32, i32
  }
  func.func @transform_5(%arg0: i32) -> (i32, i32) {
    %c0_i32 = arith.constant 0 : i32
    %c0_i32_0 = arith.constant 0 : i32
    %c0_i32_1 = arith.constant 0 : i32
    return %c0_i32, %c0_i32_0 : i32, i32
  }
  func.func @transform_6(%arg0: i32) -> (i32, i32) {
    %c0_i32 = arith.constant 0 : i32
    %c0_i32_0 = arith.constant 0 : i32
    %c0_i32_1 = arith.constant 0 : i32
    return %c0_i32, %c0_i32_0 : i32, i32
  }
  func.func @transform_7(%arg0: i32) -> (i32, i32) {
    %c0_i32 = arith.constant 0 : i32
    %c0_i32_0 = arith.constant 0 : i32
    return %c0_i32, %arg0 : i32, i32
  }
}

</mosaic_0001>

<llo_original>
// kernel: tpu_custom_call.1
$region0: #{tpu_custom_call.1}
  #allocation0 [shape = 'u32[]', space=smem, size = 0x4, offset = 0x4, fixed_abs, tag = 'smem constant byte address 0x4 - core index']
  #allocation1 [shape = 'u32[144,128]{1,0:T(1,128)}', space=vmem, size = 0x12000, scoped, tag = 'internal scratch']
  #allocation2 [shape = 'f32[1,1]{1,0:T(1,128)S(1)}', space=vmem, size = 0x200, scoped, tag = 'scoped memory for tpu_custom_call.1']
  %s0 = inlined_call_operand.vmem [shape: f32[300,32], index: 0, kind: input, shape index: {}]
  %s1 = inlined_call_operand.vmem [shape: bf16[64,32], index: 1, kind: input, shape index: {}]
  %s2 = inlined_call_operand.vmem [shape: bf16[64,1], index: 2, kind: input, shape index: {}]
  %s3 = inlined_call_operand.vmem [shape: bf16[32,64], index: 3, kind: input, shape index: {}]
  %s4 = inlined_call_operand.vmem [shape: bf16[32,1], index: 4, kind: input, shape index: {}]
  %s5 = inlined_call_operand.vmem [shape: bf16[1,32], index: 5, kind: input, shape index: {}]
  %s6 = inlined_call_operand.<no memory space> [shape: f32[1,1], index: 6, kind: input, shape index: {}]
  %s7 = inlined_call_operand.hbm [shape: f32[1,300], index: 7, kind: output, shape index: {}]
  %s8 = sld [smem:[#allocation0]]
  $region61: #{tpu_custom_call.1} parent=0
    _
  %s10 = ssub.s32 1, %s8
  %s11 = scalar_select 0, %s10, %s8
  %v12 = vstv %s6
  %13 = vst [vmem:[#allocation2] sm:$0x1] %v12
  $region1: #{tpu_custom_call.1} parent=0
    #allocation3 [shape = 'u8[1024]{0}', space=vmem, size = 0x400, scoped, tag = 'output window, operand 0']
    #allocation4 [shape = 's32[2]{0}', space=sflag, size = 0x8, scoped, tag = 'scoped memory for tpu_custom_call.1']
    %14 = vsyncpa [#allocation4], 0
    %s15 = scalar_lea.sflag [#allocation4], 1
    %16 = vsyncpa %s15, 0
    loop: start=0, step=1, limit=5
    $region2: #{tpu_custom_call.1} parent=1 // loop_pre_header
      _
    $region3: #{tpu_custom_call.1} parent=1 // loop_header
      %s18 = sphi 0, %s22
      %p19 = scmp.ge.s32.totalorder %s18, 5
      %s28 = sphi 0, %s30
      %s31 = sphi 0, %s28
      %s32 = sphi 0, %s31
      %s48 = sphi 0, %s32
      %s52 = sphi 0, %s52
      %s54 = sphi 0, %s52
      %s55 = sphi 0, %s54
      %s69 = sphi 0, %s55
      %s73 = sphi 0, %s73
      %s75 = sphi 0, %s73
      %s76 = sphi 0, %s75
      %s90 = sphi 0, %s76
      %s94 = sphi 0, %s94
      %s96 = sphi 0, %s94
      %s97 = sphi 0, %s96
      %s111 = sphi 0, %s97
      %s115 = sphi 0, %s115
      %s117 = sphi 0, %s115
      %s118 = sphi 0, %s117
      %s132 = sphi 0, %s118
      %s136 = sphi 0, %s136
      %s138 = sphi 0, %s136
      %s139 = sphi 0, %s138
      %s153 = sphi 0, %s139
      %s157 = sphi 0, %s157
      %s159 = sphi 0, %s157
      %s160 = sphi 0, %s159
      %s174 = sphi 0, %s160
      %s180 = sphi 0, %s182
      %s183 = sphi 0, %s180
      %s184 = sphi 0, %s183
      %s200 = sphi 0, %s184
    $region4: #{tpu_custom_call.1} parent=1 // loop_header_branch
      %21 = sbr.rel (%p19) target = $region8
    $region5: #{tpu_custom_call.1} parent=1 // loop_body
      %s23 = ssub.s32 %s18, 1
      %s24 = ssub.s32 %s18, 2
      %s25 = sadd.s32 %s18, 1
      %s26 = ssub.s32 %s18, %s25
      %p27 = scmp.eq.s32.totalorder %s26, 0
      %s29 = sadd.s32 %s28, 1
      %s30 = scalar_select %p27, %s28, %s29
      %p33 = pneg %p27
      %p34 = scmp.eq.s32.totalorder %s18, 2
      %p35 = por %p33, %p34
      %p36 = scmp.ne.s32.totalorder %s28, %s31
      %p37 = scmp.eq.s32.totalorder %s18, 0
      %p38 = por %p36, %p37
      %p39 = scmp.ne.s32.totalorder %s28, %s31
      %p40 = scmp.eq.s32.totalorder %s23, 2
      %p41 = por %p39, %p40
      %p42 = scmp.ne.s32.totalorder %s31, %s32
      %p43 = scmp.eq.s32.totalorder %s23, 0
      %p44 = por %p42, %p43
      %p45 = scmp.ne.s32.totalorder %s31, %s32
      %p46 = scmp.eq.s32.totalorder %s24, 2
      %p47 = por %p45, %p46
      %p49 = scmp.ne.s32.totalorder %s32, %s48
      %p50 = scmp.eq.s32.totalorder %s24, 0
      %p51 = por %p49, %p50
      %s53 = sadd.s32 %s52, 1
      %p56 = scmp.eq.s32.totalorder %s18, 2
      %p57 = scmp.ne.s32.totalorder %s52, %s54
      %p58 = scmp.eq.s32.totalorder %s18, 0
      %p59 = por %p57, %p58
      %p60 = scmp.ne.s32.totalorder %s52, %s54
      %p61 = scmp.eq.s32.totalorder %s23, 2
      %p62 = por %p60, %p61
      %p63 = scmp.ne.s32.totalorder %s54, %s55
      %p64 = scmp.eq.s32.totalorder %s23, 0
      %p65 = por %p63, %p64
      %p66 = scmp.ne.s32.totalorder %s54, %s55
      %p67 = scmp.eq.s32.totalorder %s24, 2
      %p68 = por %p66, %p67
      %p70 = scmp.ne.s32.totalorder %s55, %s69
      %p71 = scmp.eq.s32.totalorder %s24, 0
      %p72 = por %p70, %p71
      %s74 = sadd.s32 %s73, 1
      %p77 = scmp.eq.s32.totalorder %s18, 2
      %p78 = scmp.ne.s32.totalorder %s73, %s75
      %p79 = scmp.eq.s32.totalorder %s18, 0
      %p80 = por %p78, %p79
      %p81 = scmp.ne.s32.totalorder %s73, %s75
      %p82 = scmp.eq.s32.totalorder %s23, 2
      %p83 = por %p81, %p82
      %p84 = scmp.ne.s32.totalorder %s75, %s76
      %p85 = scmp.eq.s32.totalorder %s23, 0
      %p86 = por %p84, %p85
      %p87 = scmp.ne.s32.totalorder %s75, %s76
      %p88 = scmp.eq.s32.totalorder %s24, 2
      %p89 = por %p87, %p88
      %p91 = scmp.ne.s32.totalorder %s76, %s90
      %p92 = scmp.eq.s32.totalorder %s24, 0
      %p93 = por %p91, %p92
      %s95 = sadd.s32 %s94, 1
      %p98 = scmp.eq.s32.totalorder %s18, 2
      %p99 = scmp.ne.s32.totalorder %s94, %s96
      %p100 = scmp.eq.s32.totalorder %s18, 0
      %p101 = por %p99, %p100
      %p102 = scmp.ne.s32.totalorder %s94, %s96
      %p103 = scmp.eq.s32.totalorder %s23, 2
      %p104 = por %p102, %p103
      %p105 = scmp.ne.s32.totalorder %s96, %s97
      %p106 = scmp.eq.s32.totalorder %s23, 0
      %p107 = por %p105, %p106
      %p108 = scmp.ne.s32.totalorder %s96, %s97
      %p109 = scmp.eq.s32.totalorder %s24, 2
      %p110 = por %p108, %p109
      %p112 = scmp.ne.s32.totalorder %s97, %s111
      %p113 = scmp.eq.s32.totalorder %s24, 0
      %p114 = por %p112, %p113
      %s116 = sadd.s32 %s115, 1
      %p119 = scmp.eq.s32.totalorder %s18, 2
      %p120 = scmp.ne.s32.totalorder %s115, %s117
      %p121 = scmp.eq.s32.totalorder %s18, 0
      %p122 = por %p120, %p121
      %p123 = scmp.ne.s32.totalorder %s115, %s117
      %p124 = scmp.eq.s32.totalorder %s23, 2
      %p125 = por %p123, %p124
      %p126 = scmp.ne.s32.totalorder %s117, %s118
      %p127 = scmp.eq.s32.totalorder %s23, 0
      %p128 = por %p126, %p127
      %p129 = scmp.ne.s32.totalorder %s117, %s118
      %p130 = scmp.eq.s32.totalorder %s24, 2
      %p131 = por %p129, %p130
      %p133 = scmp.ne.s32.totalorder %s118, %s132
      %p134 = scmp.eq.s32.totalorder %s24, 0
      %p135 = por %p133, %p134
      %s137 = sadd.s32 %s136, 1
      %p140 = scmp.eq.s32.totalorder %s18, 2
      %p141 = scmp.ne.s32.totalorder %s136, %s138
      %p142 = scmp.eq.s32.totalorder %s18, 0
      %p143 = por %p141, %p142
      %p144 = scmp.ne.s32.totalorder %s136, %s138
      %p145 = scmp.eq.s32.totalorder %s23, 2
      %p146 = por %p144, %p145
      %p147 = scmp.ne.s32.totalorder %s138, %s139
      %p148 = scmp.eq.s32.totalorder %s23, 0
      %p149 = por %p147, %p148
      %p150 = scmp.ne.s32.totalorder %s138, %s139
      %p151 = scmp.eq.s32.totalorder %s24, 2
      %p152 = por %p150, %p151
      %p154 = scmp.ne.s32.totalorder %s139, %s153
      %p155 = scmp.eq.s32.totalorder %s24, 0
      %p156 = por %p154, %p155
      %s158 = sadd.s32 %s157, 1
      %p161 = scmp.eq.s32.totalorder %s18, 2
      %p162 = scmp.ne.s32.totalorder %s157, %s159
      %p163 = scmp.eq.s32.totalorder %s18, 0
      %p164 = por %p162, %p163
      %p165 = scmp.ne.s32.totalorder %s157, %s159
      %p166 = scmp.eq.s32.totalorder %s23, 2
      %p167 = por %p165, %p166
      %p168 = scmp.ne.s32.totalorder %s159, %s160
      %p169 = scmp.eq.s32.totalorder %s23, 0
      %p170 = por %p168, %p169
      %p171 = scmp.ne.s32.totalorder %s159, %s160
      %p172 = scmp.eq.s32.totalorder %s24, 2
      %p173 = por %p171, %p172
      %p175 = scmp.ne.s32.totalorder %s160, %s174
      %p176 = scmp.eq.s32.totalorder %s24, 0
      %p177 = por %p175, %p176
      %s178 = ssub.s32 %s18, %s25
      %p179 = scmp.eq.s32.totalorder %s178, 0
      %s181 = sadd.s32 %s180, 1
      %s182 = scalar_select %p179, %s180, %s181
      %p185 = pneg %p179
      %p186 = scmp.eq.s32.totalorder %s18, 2
      %p187 = por %p185, %p186
      %p188 = scmp.ne.s32.totalorder %s180, %s183
      %p189 = scmp.eq.s32.totalorder %s18, 0
      %p190 = por %p188, %p189
      %p191 = scmp.ne.s32.totalorder %s180, %s183
      %p192 = scmp.eq.s32.totalorder %s23, 2
      %p193 = por %p191, %p192
      %p194 = scmp.ne.s32.totalorder %s183, %s184
      %p195 = scmp.eq.s32.totalorder %s23, 0
      %p196 = por %p194, %p195
      %p197 = scmp.ne.s32.totalorder %s183, %s184
      %p198 = scmp.eq.s32.totalorder %s24, 2
      %p199 = por %p197, %p198
      %p201 = scmp.ne.s32.totalorder %s184, %s200
      %p202 = scmp.eq.s32.totalorder %s24, 0
      %p203 = por %p201, %p202
      %p204 = scmp.le.s32.totalorder 1, %s18
      %p205 = scmp.lt.s32.totalorder %s18, 4
      %p206 = pnand %p204, %p205
      %p207 = pneg %p206
      // Predicated region
      $region9: #{tpu_custom_call.1} parent=5 // pred_check
        _
      $region10: #{tpu_custom_call.1} parent=5 // pred_check_branch
        %209 = sbr.rel (%p206) target = $region12
      $region11: #{tpu_custom_call.1} parent=5 // pred_region
        %s210 = ssub.s32 %s18, 1
        // Predicated region
        $region13: #{tpu_custom_call.1} parent=11 // pred_check
          %p211 = pneg %p65
        $region14: #{tpu_custom_call.1} parent=11 // pred_check_branch
          %213 = sbr.rel (%p211) target = $region16
        $region15: #{tpu_custom_call.1} parent=11 // pred_region
          _
        $region16: #{tpu_custom_call.1} parent=11 // pred_fallthru
          _
        // Predicated region
        $region17: #{tpu_custom_call.1} parent=11 // pred_check
          %p214 = pneg %p86
        $region18: #{tpu_custom_call.1} parent=11 // pred_check_branch
          %216 = sbr.rel (%p214) target = $region20
        $region19: #{tpu_custom_call.1} parent=11 // pred_region
          _
        $region20: #{tpu_custom_call.1} parent=11 // pred_fallthru
          _
        // Predicated region
        $region21: #{tpu_custom_call.1} parent=11 // pred_check
          %p217 = pneg %p107
        $region22: #{tpu_custom_call.1} parent=11 // pred_check_branch
          %219 = sbr.rel (%p217) target = $region24
        $region23: #{tpu_custom_call.1} parent=11 // pred_region
          _
        $region24: #{tpu_custom_call.1} parent=11 // pred_fallthru
          _
        // Predicated region
        $region25: #{tpu_custom_call.1} parent=11 // pred_check
          %p220 = pneg %p128
        $region26: #{tpu_custom_call.1} parent=11 // pred_check_branch
          %222 = sbr.rel (%p220) target = $region28
        $region27: #{tpu_custom_call.1} parent=11 // pred_region
          _
        $region28: #{tpu_custom_call.1} parent=11 // pred_fallthru
          _
        // Predicated region
        $region29: #{tpu_custom_call.1} parent=11 // pred_check
          %p223 = pneg %p149
        $region30: #{tpu_custom_call.1} parent=11 // pred_check_branch
          %225 = sbr.rel (%p223) target = $region32
        $region31: #{tpu_custom_call.1} parent=11 // pred_region
          _
        $region32: #{tpu_custom_call.1} parent=11 // pred_fallthru
          _
        // Predicated region
        $region33: #{tpu_custom_call.1} parent=11 // pred_check
          %p226 = pneg %p170
        $region34: #{tpu_custom_call.1} parent=11 // pred_check_branch
          %228 = sbr.rel (%p226) target = $region36
        $region35: #{tpu_custom_call.1} parent=11 // pred_region
          _
        $region36: #{tpu_custom_call.1} parent=11 // pred_fallthru
          _
      $region12: #{tpu_custom_call.1} parent=5 // pred_fallthru
        _
      %p229 = scmp.lt.s32.totalorder %s18, 3
      // Predicated region
      $region37: #{tpu_custom_call.1} parent=5 // pred_check
        %p230 = pneg %p229
      $region38: #{tpu_custom_call.1} parent=5 // pred_check_branch
        %232 = sbr.rel (%p230) target = $region40
      $region39: #{tpu_custom_call.1} parent=5 // pred_region
        // Predicated region
        $region41: #{tpu_custom_call.1} parent=39 // pred_check
          %p233 = pneg %p38
        $region42: #{tpu_custom_call.1} parent=39 // pred_check_branch
          %235 = sbr.rel (%p233) target = $region44
        $region43: #{tpu_custom_call.1} parent=39 // pred_region
          %s236 = smul.u32 16, %s18
          %s237 = ssub.s32 38, %s236
          %p238 = scmp.lt.s32.totalorder %s237, 16
          %s239 = scalar_select %p238, %s237, 16
          %s240 = smul.u32 128, %s239
          %p241 = scmp.lt.s32.totalorder %s236, 37
          %s242 = scalar_select %p241, %s236, 37
          %s243 = smul.addr %s242, 8
          %s244 = scalar_lea.vmem %s0, %s243
          %s245 = smul.u32 16, %s18
          %s246 = ssub.s32 38, %s245
          %p247 = scmp.lt.s32.totalorder %s246, 16
          %s248 = scalar_select %p247, %s246, 16
          %s249 = smul.u32 128, %s248
        $region44: #{tpu_custom_call.1} parent=39 // pred_fallthru
          _
      $region40: #{tpu_custom_call.1} parent=5 // pred_fallthru
        _
      %p250 = scmp.le.s32.totalorder 1, %s18
      %p251 = scmp.lt.s32.totalorder %s18, 4
      %p252 = pnand %p250, %p251
      %p253 = pneg %p252
      // Predicated region
      $region45: #{tpu_custom_call.1} parent=5 // pred_check
        _
      $region46: #{tpu_custom_call.1} parent=5 // pred_check_branch
        %255 = sbr.rel (%p252) target = $region48
      $region47: #{tpu_custom_call.1} parent=5 // pred_region
        %s256 = ssub.s32 %s18, 1
        %s257 = smul.u32 16, %s23
        %s258 = ssub.s32 38, %s257
        %p259 = scmp.lt.s32.totalorder %s258, 16
        %s260 = scalar_select %p259, %s258, 16
        %s261 = smul.u32 128, %s260
        %p262 = scmp.lt.s32.totalorder %s257, 37
        %s263 = scalar_select %p262, %s257, 37
        %s264 = smul.addr %s263, 8
        %s265 = scalar_lea.vmem %s0, %s264
        %p266 = pneg %p44
        %p267 = pneg %p41
        %p268 = pneg %p65
        %p269 = pneg %p62
        %p270 = pneg %p86
        %p271 = pneg %p83
        %p272 = pneg %p107
        %p273 = pneg %p104
        %p274 = pneg %p128
        %p275 = pneg %p125
        %p276 = pneg %p149
        %p277 = pneg %p146
        %p278 = pneg %p170
        %p279 = pneg %p167
        %p280 = pneg %p196
        %p281 = pneg %p193
        %s282 = sand.u32 %s183, 1
        %s283 = scalar_lea.sflag [#allocation4], %s282
        %s284 = sand.u32 %s183, 1
        %s285 = scalar_lea.vmem [#allocation3], %s284
        %s286 = smul.u32 16, %s23
        %s287 = ssub.s32 38, %s286
        %p288 = scmp.lt.s32.totalorder %s287, 16
        %s289 = scalar_select %p288, %s287, 16
        %s290 = smul.u32 128, %s289
        %p291 = scmp.lt.s32.totalorder %s286, 37
        %s292 = scalar_select %p291, %s286, 37
        %s293 = smul.addr %s292, 8
        %s294 = scalar_lea.vmem %s0, %s293
        %s295 = smul.u32 16, %s23
        %s296 = ssub.s32 38, %s295
        %p297 = scmp.lt.s32.totalorder %s296, 16
        %s298 = scalar_select %p297, %s296, 16
        %s299 = smul.u32 128, %s298
        %v302 = vld [vmem:[%s294] sm:$0xff]
        %v303 = vld [vmem:[%s294 + $0x8] sm:$0xff]
        %v304 = vld [vmem:[%s294 + $0x10] sm:$0xff]
        %v305 = vld [vmem:[%s294 + $0x18] sm:$0xff]
        %v306 = vld [vmem:[%s294 + $0x20] sm:$0xff]
        %v307 = vld [vmem:[%s294 + $0x28] sm:$0xff]
        %v308 = vld [vmem:[%s294 + $0x30] sm:$0xff]
        %v309 = vld [vmem:[%s294 + $0x38] sm:$0xff]
        %v310 = vld [vmem:[%s294 + $0x40] sm:$0xff]
        %v311 = vld [vmem:[%s294 + $0x48] sm:$0xff]
        %v312 = vld [vmem:[%s294 + $0x50] sm:$0xff]
        %v313 = vld [vmem:[%s294 + $0x58] sm:$0xff]
        %v314 = vld [vmem:[%s294 + $0x60] sm:$0xff]
        %v315 = vld [vmem:[%s294 + $0x68] sm:$0xff]
        %v316 = vld [vmem:[%s294 + $0x70] sm:$0xff]
        %v317 = vld [vmem:[%s294 + $0x78] sm:$0xff]
        %v318 = vpack.c.bf16 %v303, %v302
        %v319 = vpack.c.bf16 %v305, %v304
        %v320 = vpack.c.bf16 %v307, %v306
        %v321 = vpack.c.bf16 %v309, %v308
        %v322 = vpack.c.bf16 %v311, %v310
        %v323 = vpack.c.bf16 %v313, %v312
        %v324 = vpack.c.bf16 %v315, %v314
        %v325 = vpack.c.bf16 %v317, %v316
        %v326 = vld [vmem:[%s1] sm:$0xf]
        %v327 = vld [vmem:[%s1 + $0x4] sm:$0xf]
        %v328 = vld [vmem:[%s1 + $0x8] sm:$0xf]
        %v329 = vld [vmem:[%s1 + $0xc] sm:$0xf]
        %v330 = vld [vmem:[%s1 + $0x10] sm:$0xf]
        %v331 = vld [vmem:[%s1 + $0x14] sm:$0xf]
        %v332 = vld [vmem:[%s1 + $0x18] sm:$0xf]
        %v333 = vld [vmem:[%s1 + $0x1c] sm:$0xf]
        %v342 = vunpack.c.l.b16 %v326
        %v343 = vunpack.c.l.b16 %v327
        %v344 = vunpack.c.l.b16 %v328
        %v345 = vunpack.c.l.b16 %v329
        %v346 = vunpack.c.l.b16 %v330
        %v347 = vunpack.c.l.b16 %v331
        %v348 = vunpack.c.l.b16 %v332
        %v349 = vunpack.c.l.b16 %v333
        %v350 = vpack.c.b16 %v343, %v342
        %v351 = vpack.c.b16 %v345, %v344
        %v352 = vpack.c.b16 %v347, %v346
        %v353 = vpack.c.b16 %v349, %v348
        %vm354 = vcmask 261120
        %v356 = vsel %vm354, %v350, 0
        %v359 = vsel %vm354, %v351, 0
        %v362 = vsel %vm354, %v352, 0
        %v365 = vsel %vm354, %v353, 0
        %v368 = vsel %vm354, %v318, 0
        %v371 = vsel %vm354, %v319, 0
        %v374 = vsel %vm354, %v320, 0
        %v377 = vsel %vm354, %v321, 0
        %v380 = vsel %vm354, %v322, 0
        %v383 = vsel %vm354, %v323, 0
        %v386 = vsel %vm354, %v324, 0
        %v389 = vsel %vm354, %v325, 0
        %391 = vmatprep.subr.bf16.mxu0 0
        %392 = vmatpush1.bf16.xpose.msra.mxu0 %v389
        %393 = vmatprep.subr.bf16.mxu0 0
        %394 = vmatpush1.bf16.xpose.msra.mxu0 %v386
        %395 = vmatprep.subr.bf16.mxu0 0
        %396 = vmatpush1.bf16.xpose.msra.mxu0 %v383
        %397 = vmatprep.subr.bf16.mxu0 0
        %398 = vmatpush1.bf16.xpose.msra.mxu0 %v380
        %399 = vmatprep.subr.bf16.mxu0 0
        %400 = vmatpush1.bf16.xpose.msra.mxu0 %v377
        %401 = vmatprep.subr.bf16.mxu0 0
        %402 = vmatpush1.bf16.xpose.msra.mxu0 %v374
        %403 = vmatprep.subr.bf16.mxu0 0
        %404 = vmatpush1.bf16.xpose.msra.mxu0 %v371
        %405 = vmatprep.subr.bf16.mxu0 0
        %406 = vmatpush1.bf16.xpose.msra.mxu0 %v368
        %407 = vmatprep.subr.bf16.mxu0 0
        %408 = vmatpush2.bf16.xpose.msra.mxu0 0
        %409 = vmatprep.subr.bf16.mxu0 0
        %410 = vmatpush2.bf16.xpose.msra.mxu0 0
        %411 = vmatprep.subr.bf16.mxu0 0
        %412 = vmatpush2.bf16.xpose.msra.mxu0 0
        %413 = vmatprep.subr.bf16.mxu0 0
        %414 = vmatpush2.bf16.xpose.msra.mxu0 0
        %415 = vmatprep.subr.bf16.mxu0 0
        %416 = vmatpush2.bf16.xpose.msra.mxu0 0
        %417 = vmatprep.subr.bf16.mxu0 0
        %418 = vmatpush2.bf16.xpose.msra.mxu0 0
        %419 = vmatprep.subr.bf16.mxu0 0
        %420 = vmatpush2.bf16.xpose.msra.mxu0 0
        %421 = vmatprep.subr.bf16.mxu0 0
        %422 = vmatpush2.bf16.xpose.msra.mxu0 0
        %423 = vmatprep.mubr.bf16.mxu0 0
        %424 = vmatmul.mubr.bf16.gmra.mxu0 %v356
        %v425 = vpop.f32.mrf.mxu0
        %v426 = vadd.f32 0.0, %v425
        %v427 = vpop.f32.mrf.mxu0
        %v428 = vpop.f32.mrf.mxu0
        %v429 = vadd.f32 0.0, %v428
        %v430 = vpop.f32.mrf.mxu0
        %431 = vmatprep.mubr.bf16.mxu0 0
        %432 = vmatmul.mubr.bf16.gmra.mxu0 %v359
        %v433 = vpop.f32.mrf.mxu0
        %v434 = vadd.f32 0.0, %v433
        %v435 = vpop.f32.mrf.mxu0
        %v436 = vpop.f32.mrf.mxu0
        %v437 = vadd.f32 0.0, %v436
        %v438 = vpop.f32.mrf.mxu0
        %439 = vmatprep.mubr.bf16.mxu0 0
        %440 = vmatmul.mubr.bf16.gmra.mxu0 %v362
        %v441 = vpop.f32.mrf.mxu0
        %v442 = vadd.f32 0.0, %v441
        %v443 = vpop.f32.mrf.mxu0
        %v444 = vpop.f32.mrf.mxu0
        %v445 = vadd.f32 0.0, %v444
        %v446 = vpop.f32.mrf.mxu0
        %447 = vmatprep.mubr.bf16.mxu0 0
        %448 = vmatmul.mubr.bf16.gmra.mxu0 %v365
        %v449 = vpop.f32.mrf.mxu0
        %v450 = vadd.f32 0.0, %v449
        %v451 = vpop.f32.mrf.mxu0
        %v452 = vpop.f32.mrf.mxu0
        %v453 = vadd.f32 0.0, %v452
        %v454 = vpop.f32.mrf.mxu0
        %455 = vdwg.mxu0
        %v456 = vpack.c.bf16 %v429, %v426
        %v457 = vpack.c.bf16 %v437, %v434
        %v458 = vpack.c.bf16 %v445, %v442
        %v459 = vpack.c.bf16 %v453, %v450
        %v460 = vld [vmem:[%s2] sm:$0xf]
        %v461 = vld [vmem:[%s2 + $0x4] sm:$0xf]
        %v462 = vld [vmem:[%s2 + $0x8] sm:$0xf]
        %v463 = vld [vmem:[%s2 + $0xc] sm:$0xf]
        %v464 = vld [vmem:[%s2 + $0x10] sm:$0xf]
        %v465 = vld [vmem:[%s2 + $0x14] sm:$0xf]
        %v466 = vld [vmem:[%s2 + $0x18] sm:$0xf]
        %v467 = vld [vmem:[%s2 + $0x1c] sm:$0xf]
        %469 = vset.pattern.permute.xlu0 0
        %470 = vperm.xlu0 %469, %v460
        %v471 = vpop.permute.xlu0 %470
        %v474 = vunpack.c.l.s4 839922192
        %v475 = vunpack.c.0.s8 %v474
        %v476 = vlaneseq
        %v477 = vshrl.u32 %v476, 7
        %v478 = vsub.s32 %v475, %v477
        %v479 = vrot.slane %v471, %v478
        %481 = vset.pattern.permute.xlu0 0
        %482 = vperm.xlu0 %481, %v461
        %v483 = vpop.permute.xlu0 %482
        %v486 = vunpack.c.l.s4 839922192
        %v487 = vunpack.c.0.s8 %v486
        %v488 = vlaneseq
        %v489 = vshrl.u32 %v488, 7
        %v490 = vsub.s32 %v487, %v489
        %v491 = vrot.slane %v483, %v490
        %493 = vset.pattern.permute.xlu0 0
        %494 = vperm.xlu0 %493, %v462
        %v495 = vpop.permute.xlu0 %494
        %v498 = vunpack.c.l.s4 839922192
        %v499 = vunpack.c.0.s8 %v498
        %v500 = vlaneseq
        %v501 = vshrl.u32 %v500, 7
        %v502 = vsub.s32 %v499, %v501
        %v503 = vrot.slane %v495, %v502
        %505 = vset.pattern.permute.xlu0 0
        %506 = vperm.xlu0 %505, %v463
        %v507 = vpop.permute.xlu0 %506
        %v510 = vunpack.c.l.s4 839922192
        %v511 = vunpack.c.0.s8 %v510
        %v512 = vlaneseq
        %v513 = vshrl.u32 %v512, 7
        %v514 = vsub.s32 %v511, %v513
        %v515 = vrot.slane %v507, %v514
        %517 = vset.pattern.permute.xlu0 0
        %518 = vperm.xlu0 %517, %v464
        %v519 = vpop.permute.xlu0 %518
        %v522 = vunpack.c.l.s4 839922192
        %v523 = vunpack.c.0.s8 %v522
        %v524 = vlaneseq
        %v525 = vshrl.u32 %v524, 7
        %v526 = vsub.s32 %v523, %v525
        %v527 = vrot.slane %v519, %v526
        %529 = vset.pattern.permute.xlu0 0
        %530 = vperm.xlu0 %529, %v465
        %v531 = vpop.permute.xlu0 %530
        %v534 = vunpack.c.l.s4 839922192
        %v535 = vunpack.c.0.s8 %v534
        %v536 = vlaneseq
        %v537 = vshrl.u32 %v536, 7
        %v538 = vsub.s32 %v535, %v537
        %v539 = vrot.slane %v531, %v538
        %541 = vset.pattern.permute.xlu0 0
        %542 = vperm.xlu0 %541, %v466
        %v543 = vpop.permute.xlu0 %542
        %v546 = vunpack.c.l.s4 839922192
        %v547 = vunpack.c.0.s8 %v546
        %v548 = vlaneseq
        %v549 = vshrl.u32 %v548, 7
        %v550 = vsub.s32 %v547, %v549
        %v551 = vrot.slane %v543, %v550
        %553 = vset.pattern.permute.xlu0 0
        %554 = vperm.xlu0 %553, %v467
        %v555 = vpop.permute.xlu0 %554
        %v558 = vunpack.c.l.s4 839922192
        %v559 = vunpack.c.0.s8 %v558
        %v560 = vlaneseq
        %v561 = vshrl.u32 %v560, 7
        %v562 = vsub.s32 %v559, %v561
        %v563 = vrot.slane %v555, %v562
        %v572 = vunpack.c.l.b16 %v479
        %v573 = vunpack.c.l.b16 %v491
        %v574 = vunpack.c.l.b16 %v503
        %v575 = vunpack.c.l.b16 %v515
        %v576 = vunpack.c.l.b16 %v527
        %v577 = vunpack.c.l.b16 %v539
        %v578 = vunpack.c.l.b16 %v551
        %v579 = vunpack.c.l.b16 %v563
        %v580 = vpack.c.b16 %v573, %v572
        %v581 = vpack.c.b16 %v575, %v574
        %v582 = vpack.c.b16 %v577, %v576
        %v583 = vpack.c.b16 %v579, %v578
        %v588 = vadd.bf16 %v456, %v580
        %v589 = vadd.bf16 %v457, %v581
        %v590 = vadd.bf16 %v458, %v582
        %v591 = vadd.bf16 %v459, %v583
        %v592 = vmul.bf16 %v588, 1045249613
        %v593 = vmul.bf16 %v589, 1045249613
        %v594 = vmul.bf16 %v590, 1045249613
        %v595 = vmul.bf16 %v591, 1045249613
        %v596 = vmax.bf16 %v588, %v592
        %v597 = vmax.bf16 %v589, %v593
        %v598 = vmax.bf16 %v590, %v594
        %v599 = vmax.bf16 %v591, %v595
        %v600 = vld [vmem:[%s3] sm:$0xf]
        %v601 = vld [vmem:[%s3 + $0x4] sm:$0xf]
        %v602 = vld [vmem:[%s3 + $0x8] sm:$0xf]
        %v603 = vld [vmem:[%s3 + $0xc] sm:$0xf]
        %v608 = vunpack.c.l.b16 %v600
        %v609 = vunpack.c.l.b16 %v601
        %v610 = vunpack.c.l.b16 %v602
        %v611 = vunpack.c.l.b16 %v603
        %v612 = vpack.c.b16 %v609, %v608
        %v613 = vpack.c.b16 %v611, %v610
        %vm614 = vcmask 523264
        %v616 = vsel %vm614, %v612, 0
        %v619 = vsel %vm614, %v613, 0
        %621 = vmatprep.subr.bf16.mxu0 0
        %622 = vmatpush1.bf16.msra.mxu0 0
        %623 = vmatprep.subr.bf16.mxu0 0
        %624 = vmatpush1.bf16.msra.mxu0 0
        %625 = vmatprep.subr.bf16.mxu0 0
        %626 = vmatpush1.bf16.msra.mxu0 0
        %627 = vmatprep.subr.bf16.mxu0 0
        %628 = vmatpush1.bf16.msra.mxu0 0
        %629 = vmatprep.subr.bf16.mxu0 0
        %630 = vmatpush1.bf16.msra.mxu0 %v599
        %631 = vmatprep.subr.bf16.mxu0 0
        %632 = vmatpush1.bf16.msra.mxu0 %v598
        %633 = vmatprep.subr.bf16.mxu0 0
        %634 = vmatpush1.bf16.msra.mxu0 %v597
        %635 = vmatprep.subr.bf16.mxu0 0
        %636 = vmatpush1.bf16.msra.mxu0 %v596
        %637 = vmatprep.subr.bf16.mxu0 0
        %638 = vmatpush2.bf16.msra.mxu0 0
        %639 = vmatprep.subr.bf16.mxu0 0
        %640 = vmatpush2.bf16.msra.mxu0 0
        %641 = vmatprep.subr.bf16.mxu0 0
        %642 = vmatpush2.bf16.msra.mxu0 0
        %643 = vmatprep.subr.bf16.mxu0 0
        %644 = vmatpush2.bf16.msra.mxu0 0
        %645 = vmatprep.subr.bf16.mxu0 0
        %646 = vmatpush2.bf16.msra.mxu0 0
        %647 = vmatprep.subr.bf16.mxu0 0
        %648 = vmatpush2.bf16.msra.mxu0 0
        %649 = vmatprep.subr.bf16.mxu0 0
        %650 = vmatpush2.bf16.msra.mxu0 0
        %651 = vmatprep.subr.bf16.mxu0 0
        %652 = vmatpush2.bf16.msra.mxu0 0
        %653 = vmatprep.mubr.bf16.mxu0 0
        %654 = vmatmul.mubr.bf16.gmra.mxu0 %v616
        %v655 = vpop.f32.mrf.mxu0
        %v656 = vadd.f32 0.0, %v655
        %v657 = vpop.f32.mrf.mxu0
        %v658 = vpop.f32.mrf.mxu0
        %v659 = vadd.f32 0.0, %v658
        %v660 = vpop.f32.mrf.mxu0
        %661 = vmatprep.mubr.bf16.mxu0 0
        %662 = vmatmul.mubr.bf16.gmra.mxu0 %v619
        %v663 = vpop.f32.mrf.mxu0
        %v664 = vadd.f32 0.0, %v663
        %v665 = vpop.f32.mrf.mxu0
        %v666 = vpop.f32.mrf.mxu0
        %v667 = vadd.f32 0.0, %v666
        %v668 = vpop.f32.mrf.mxu0
        %669 = vdwg.mxu0
        %v670 = vpack.c.bf16 %v659, %v656
        %v671 = vpack.c.bf16 %v667, %v664
        %v672 = vld [vmem:[%s4] sm:$0xf]
        %v673 = vld [vmem:[%s4 + $0x4] sm:$0xf]
        %v674 = vld [vmem:[%s4 + $0x8] sm:$0xf]
        %v675 = vld [vmem:[%s4 + $0xc] sm:$0xf]
        %677 = vset.pattern.permute.xlu0 0
        %678 = vperm.xlu0 %677, %v672
        %v679 = vpop.permute.xlu0 %678
        %v682 = vunpack.c.l.s4 839922192
        %v683 = vunpack.c.0.s8 %v682
        %v684 = vlaneseq
        %v685 = vshrl.u32 %v684, 7
        %v686 = vsub.s32 %v683, %v685
        %v687 = vrot.slane %v679, %v686
        %689 = vset.pattern.permute.xlu0 0
        %690 = vperm.xlu0 %689, %v673
        %v691 = vpop.permute.xlu0 %690
        %v694 = vunpack.c.l.s4 839922192
        %v695 = vunpack.c.0.s8 %v694
        %v696 = vlaneseq
        %v697 = vshrl.u32 %v696, 7
        %v698 = vsub.s32 %v695, %v697
        %v699 = vrot.slane %v691, %v698
        %701 = vset.pattern.permute.xlu0 0
        %702 = vperm.xlu0 %701, %v674
        %v703 = vpop.permute.xlu0 %702
        %v706 = vunpack.c.l.s4 839922192
        %v707 = vunpack.c.0.s8 %v706
        %v708 = vlaneseq
        %v709 = vshrl.u32 %v708, 7
        %v710 = vsub.s32 %v707, %v709
        %v711 = vrot.slane %v703, %v710
        %713 = vset.pattern.permute.xlu0 0
        %714 = vperm.xlu0 %713, %v675
        %v715 = vpop.permute.xlu0 %714
        %v718 = vunpack.c.l.s4 839922192
        %v719 = vunpack.c.0.s8 %v718
        %v720 = vlaneseq
        %v721 = vshrl.u32 %v720, 7
        %v722 = vsub.s32 %v719, %v721
        %v723 = vrot.slane %v715, %v722
        %v728 = vunpack.c.l.b16 %v687
        %v729 = vunpack.c.l.b16 %v699
        %v730 = vunpack.c.l.b16 %v711
        %v731 = vunpack.c.l.b16 %v723
        %v732 = vpack.c.b16 %v729, %v728
        %v733 = vpack.c.b16 %v731, %v730
        %v736 = vadd.bf16 %v670, %v732
        %v737 = vadd.bf16 %v671, %v733
        %v738 = vmul.bf16 %v736, 1045249613
        %v739 = vmul.bf16 %v737, 1045249613
        %v740 = vmax.bf16 %v736, %v738
        %v741 = vmax.bf16 %v737, %v739
        %v742 = vld [vmem:[%s5] sm:$0x1]
        %v743 = vld [vmem:[#allocation2] sm:$0x1]
        %745 = vset.pattern.permute.xlu0 0
        %746 = vperm.xlu0 %745, %v743
        %v747 = vpop.permute.xlu0 %746
        %v749 = vlaneseq
        %v750 = vshrl.u32 %v749, 7
        %v751 = vsub.s32 0, %v750
        %v752 = vrot.slane %v747, %v751
        %v754 = vsel %vm354, %v742, 0
        %756 = vmatprep.subr.bf16.mxu0 0
        %757 = vmatpush1.bf16.msra.mxu0 0
        %758 = vmatprep.subr.bf16.mxu0 0
        %759 = vmatpush1.bf16.msra.mxu0 0
        %760 = vmatprep.subr.bf16.mxu0 0
        %761 = vmatpush1.bf16.msra.mxu0 0
        %762 = vmatprep.subr.bf16.mxu0 0
        %763 = vmatpush1.bf16.msra.mxu0 0
        %764 = vmatprep.subr.bf16.mxu0 0
        %765 = vmatpush1.bf16.msra.mxu0 0
        %766 = vmatprep.subr.bf16.mxu0 0
        %767 = vmatpush1.bf16.msra.mxu0 0
        %768 = vmatprep.subr.bf16.mxu0 0
        %769 = vmatpush1.bf16.msra.mxu0 %v741
        %770 = vmatprep.subr.bf16.mxu0 0
        %771 = vmatpush1.bf16.msra.mxu0 %v740
        %772 = vmatprep.subr.bf16.mxu0 0
        %773 = vmatpush2.bf16.msra.mxu0 0
        %774 = vmatprep.subr.bf16.mxu0 0
        %775 = vmatpush2.bf16.msra.mxu0 0
        %776 = vmatprep.subr.bf16.mxu0 0
        %777 = vmatpush2.bf16.msra.mxu0 0
        %778 = vmatprep.subr.bf16.mxu0 0
        %779 = vmatpush2.bf16.msra.mxu0 0
        %780 = vmatprep.subr.bf16.mxu0 0
        %781 = vmatpush2.bf16.msra.mxu0 0
        %782 = vmatprep.subr.bf16.mxu0 0
        %783 = vmatpush2.bf16.msra.mxu0 0
        %784 = vmatprep.subr.bf16.mxu0 0
        %785 = vmatpush2.bf16.msra.mxu0 0
        %786 = vmatprep.subr.bf16.mxu0 0
        %787 = vmatpush2.bf16.msra.mxu0 0
        %788 = vmatprep.mubr.bf16.mxu0 0
        %789 = vmatmul.mubr.bf16.gmra.mxu0 %v754
        %v790 = vpop.f32.mrf.mxu0
        %v791 = vadd.f32 %v752, %v790
        %v792 = vpop.f32.mrf.mxu0
        %v793 = vpop.f32.mrf.mxu0
        %v794 = vpop.f32.mrf.mxu0
        %795 = vdwg.mxu0
        %v796 = vsub.f32 0.0, %v791
        %v797 = vmul.f32 %v796, 1.442695
        %v798 = vpow.pop %v797
        %v799 = vadd.f32 %v798, 1.0
        %v800 = vrcp.pop %v799
        %801 = vst [vmem:[%s285] sm:$0x1] %v800
        %s802 = sand.u32 %s183, 1
        %s803 = scalar_lea.sflag [#allocation4], %s802
        %s804 = sand.u32 %s183, 1
        %s805 = scalar_lea.vmem [#allocation3], %s804
        // Predicated region
        $region49: #{tpu_custom_call.1} parent=47 // pred_check
          %p806 = pneg %p193
        $region50: #{tpu_custom_call.1} parent=47 // pred_check_branch
          %808 = sbr.rel (%p806) target = $region52
        $region51: #{tpu_custom_call.1} parent=47 // pred_region
          %s810 = ssub.s32 16, 16
          %811 = vsyncadd %s803, %s810
          %s812 = smul.addr %s23, 16
          %s813 = scalar_lea.hbm %s7, %s812
          %s815 = sshll.u32 %s805, 4
          %s816 = int_to_ptr.vmem [resolvable:$true] %s815
          %818 = dma.vmem_to_hbm [thread:$0]  %s816, 16, %s813, %s803
        $region52: #{tpu_custom_call.1} parent=47 // pred_fallthru
          _
      $region48: #{tpu_custom_call.1} parent=5 // pred_fallthru
        _
      %p819 = scmp.le.s32.totalorder 2, %s18
      // Predicated region
      $region53: #{tpu_custom_call.1} parent=5 // pred_check
        %p820 = pneg %p819
      $region54: #{tpu_custom_call.1} parent=5 // pred_check_branch
        %822 = sbr.rel (%p820) target = $region56
      $region55: #{tpu_custom_call.1} parent=5 // pred_region
        %s823 = ssub.s32 %s18, 2
        // Predicated region
        $region57: #{tpu_custom_call.1} parent=55 // pred_check
          %p824 = pneg %p199
        $region58: #{tpu_custom_call.1} parent=55 // pred_check_branch
          %826 = sbr.rel (%p824) target = $region60
        $region59: #{tpu_custom_call.1} parent=55 // pred_region
          %s827 = sand.u32 %s184, 1
          %s828 = scalar_lea.sflag [#allocation4], %s827
          %s829 = sand.u32 %s184, 1
          %s830 = scalar_lea.vmem [#allocation3], %s829
          %831 = dma.done %s828, 16
        $region60: #{tpu_custom_call.1} parent=55 // pred_fallthru
          _
      $region56: #{tpu_custom_call.1} parent=5 // pred_fallthru
        _
    $region6: #{tpu_custom_call.1} parent=1 // loop_footer
      %s22 = sadd.s32 1, %s18
    $region7: #{tpu_custom_call.1} parent=1 // loop_footer_branch
      %17 = sbr.rel target = $region3
    $region8: #{tpu_custom_call.1} parent=1 // loop_exit
      _
    %832 = vsyncpa [#allocation4], 1
    %s833 = scalar_lea.sflag [#allocation4], 1
    %834 = vsyncpa %s833, 1

</llo_original>
